<compile_context>
chip_gen: v7x
topology: tpu7x:2x2x1
jax: 0.10.0
libtpu: 0.0.40
codegen_flags: <defaults>
</compile_context>

<pallas_src>
import jax
import jax.numpy as jnp
from jax.experimental import pallas as pl
from jax.experimental.pallas import tpu as pltpu


HIDDEN = 50
PAD_SUB = 56    # HIDDEN rounded up to the 8-sublane tile
PAD_LANE = 128  # lane tile width


def tinynet_kernel(x_ref, w_ref, b_ref, o_ref):
    # x_ref: (2, TILE_B)    w_ref: (6, 56, 128)    b_ref: (6, 56, 1)
    # o_ref: (1, TILE_B)
    x = x_ref[...]

    # ---- layer 1: in_features = 2 -> VPU broadcast-FMAs (no MXU pass) ----
    h = (w_ref[0, :HIDDEN, 0:1] * x[0:1, :]
         + w_ref[0, :HIDDEN, 1:2] * x[1:2, :]
         + b_ref[0, :HIDDEN, :])
    h = jnp.maximum(h, 0.0)                                    # (50, TILE_B)

    # ---- layers 2..5: 50x50 matmuls on the MXU, f32 accumulation ----
    for l in range(1, 5):
        w = w_ref[l, :HIDDEN, :HIDDEN]                         # (50, 50)
        b = b_ref[l, :HIDDEN, :]                               # (50, 1)
        h = jnp.dot(w, h, preferred_element_type=jnp.float32) + b
        h = jnp.maximum(h, 0.0)

    # ---- layer 6: out_features = 1 -> multiply + sublane reduce (XLU) ----
    w6 = w_ref[5, :HIDDEN, 0:1]                                # (50, 1) == W6^T
    b6 = b_ref[5, 0:1, 0:1]                                    # (1, 1)
    o_ref[...] = jnp.sum(w6 * h, axis=0, keepdims=True) + b6


def _pack_params(params):
    """Pack 6 (W, b) pairs (PyTorch layout: W (out,in), b (out,)) into slabs."""
    w_slab = jnp.zeros((6, PAD_SUB, PAD_LANE), jnp.float32)
    b_slab = jnp.zeros((6, PAD_SUB, 1), jnp.float32)
    for l, (w, b) in enumerate(params):
        w = jnp.asarray(w, jnp.float32)
        b = jnp.asarray(b, jnp.float32)
        if l == 5:
            # Store W6^T as a column so the kernel reduces over sublanes
            # instead of issuing a 1-wide MXU pass.
            w_slab = w_slab.at[l, :HIDDEN, 0:1].set(w.T)
            b_slab = b_slab.at[l, 0, 0].set(b[0])
        else:
            out_d, in_d = w.shape
            w_slab = w_slab.at[l, :out_d, :in_d].set(w)
            b_slab = b_slab.at[l, :out_d, 0].set(b)
    return w_slab, b_slab


def tinynet_forward(x, params, *, tile_b=512):
    """x: (B, 2) float32.  params: 6 (W, b) pairs in PyTorch nn.Linear layout."""
    batch = x.shape[0]
    w_slab, b_slab = _pack_params(params)

    # Batch sits on the lane axis -> pad it up to a multiple of the lane tile.
    tb = min(tile_b, pl.cdiv(batch, PAD_LANE) * PAD_LANE)
    b_pad = pl.cdiv(batch, tb) * tb
    x_t = jnp.zeros((2, b_pad), jnp.float32).at[:, :batch].set(x.T)

    grid = (b_pad // tb,)
    flops = 2 * b_pad * (2 * HIDDEN + 4 * HIDDEN * HIDDEN + HIDDEN)
    bytes_accessed = (x_t.size + b_pad + w_slab.size + b_slab.size) * 4

    out = pl.pallas_call(
        tinynet_kernel,
        out_shape=jax.ShapeDtypeStruct((1, b_pad), jnp.float32),
        grid_spec=pltpu.PrefetchScalarGridSpec(
            num_scalar_prefetch=0,
            grid=grid,
            in_specs=[
                # x: new lane tile per grid step (pipelined HBM<->VMEM).
                pl.BlockSpec((2, tb), lambda i: (0, i)),
                # parameter slabs: constant block index -> resident in VMEM.
                pl.BlockSpec((6, PAD_SUB, PAD_LANE), lambda i: (0, 0, 0)),
                pl.BlockSpec((6, PAD_SUB, 1), lambda i: (0, 0, 0)),
            ],
            out_specs=pl.BlockSpec((1, tb), lambda i: (0, i)),
        ),
        compiler_params=pltpu.CompilerParams(
            dimension_semantics=("parallel",)),
        cost_estimate=pl.CostEstimate(
            flops=flops, transcendentals=0, bytes_accessed=bytes_accessed),
    )(x_t, w_slab, b_slab)

    # (1, b_pad) -> (B, 1), dropping the padded tail.
    return out[0, :batch].reshape(batch, 1)


def init_tinynet_params(key):
    """PyTorch nn.Linear default init: U(-1/sqrt(fan_in), 1/sqrt(fan_in))."""
    dims = [(2, HIDDEN)] + [(HIDDEN, HIDDEN)] * 4 + [(HIDDEN, 1)]
    params = []
    for fan_in, fan_out in dims:
        key, kw, kb = jax.random.split(key, 3)
        bound = 1.0 / float(fan_in) ** 0.5
        w = jax.random.uniform(kw, (fan_out, fan_in), jnp.float32,
                               minval=-bound, maxval=bound)
        b = jax.random.uniform(kb, (fan_out,), jnp.float32,
                               minval=-bound, maxval=bound)
        params.append((w, b))
    return params


def tinynet_reference(x, params):
    """Pure-JAX reference (PyTorch layout) for correctness checking."""
    h = x
    for i, (w, b) in enumerate(params):
        h = h @ w.T + b
        if i < len(params) - 1:
            h = jnp.maximum(h, 0.0)
    return h


if __name__ == "__main__":
    key = jax.random.PRNGKey(0)
    key_p, key_x1, key_x2 = jax.random.split(key, 3)
    params = init_tinynet_params(key_p)

    # Small deterministic input consistent with TinyNet.forward: (batch=8, 2).
    x = jax.random.normal(key_x1, (8, 2), jnp.float32)
    out = jax.block_until_ready(tinynet_forward(x, params))
    ref = tinynet_reference(x, params)
    assert out.shape == (8, 1), out.shape
    assert jnp.allclose(out, ref, atol=1e-4, rtol=1e-4)

    # Second check: multi-step grid + non-multiple batch (600 -> 2 tiles of 512).
    x2 = jax.random.normal(key_x2, (600, 2), jnp.float32)
    out2 = jax.block_until_ready(tinynet_forward(x2, params))
    ref2 = tinynet_reference(x2, params)
    assert out2.shape == (600, 1), out2.shape
    assert jnp.allclose(out2, ref2, atol=1e-4, rtol=1e-4)

    print("KERNEL_OK")
</pallas_src>

<mosaic_0001>
module attributes {stable_mosaic.version = 11 : i64} {
  func.func @tinynet_kernel(%arg0: i32, %arg1: memref<2x128xf32, #tpu.memory_space<vmem>>, %arg2: memref<6x56x128xf32, #tpu.memory_space<vmem>>, %arg3: memref<6x56x1xf32, #tpu.memory_space<vmem>>, %arg4: memref<1x128xf32, #tpu.memory_space<vmem>>) attributes {dimension_semantics = [#tpu.dimension_semantics<parallel>], iteration_bounds = array<i64: 1>, scalar_prefetch = 0 : i64, scratch_operands = 0 : i64, tpu.core_type = #tpu.core_type<tc>, window_params = [{transform_indices = @transform_0, window_bounds = array<i64: 2, 128>}, {pipeline_mode = #tpu.pipeline_mode<synchronous>, transform_indices = @transform_1, window_bounds = array<i64: 6, 56, 128>}, {pipeline_mode = #tpu.pipeline_mode<synchronous>, transform_indices = @transform_2, window_bounds = array<i64: 6, 56, 1>}, {transform_indices = @transform_3, window_bounds = array<i64: 1, 128>}]} {
    %c0 = arith.constant 0 : index
    %c0_0 = arith.constant 0 : index
    %0 = vector.load %arg1[%c0, %c0_0] : memref<2x128xf32, #tpu.memory_space<vmem>>, vector<2x128xf32>
    %c0_1 = arith.constant 0 : index
    %c0_2 = arith.constant 0 : index
    %c0_3 = arith.constant 0 : index
    %1 = vector.load %arg2[%c0_1, %c0_2, %c0_3] : memref<6x56x128xf32, #tpu.memory_space<vmem>>, vector<1x50x1xf32>
    %2 = vector.shape_cast %1 : vector<1x50x1xf32> to vector<50x1xf32>
    %3 = vector.extract_strided_slice %0 {offsets = [0, 0], sizes = [1, 128], strides = [1, 1]} : vector<2x128xf32> to vector<1x128xf32>
    %4 = vector.broadcast %2 : vector<50x1xf32> to vector<50x128xf32>
    %5 = vector.broadcast %3 : vector<1x128xf32> to vector<50x128xf32>
    %6 = arith.mulf %4, %5 : vector<50x128xf32>
    %c0_4 = arith.constant 0 : index
    %c0_5 = arith.constant 0 : index
    %c1 = arith.constant 1 : index
    %7 = vector.load %arg2[%c0_4, %c0_5, %c1] : memref<6x56x128xf32, #tpu.memory_space<vmem>>, vector<1x50x1xf32>
    %8 = vector.shape_cast %7 : vector<1x50x1xf32> to vector<50x1xf32>
    %9 = vector.extract_strided_slice %0 {offsets = [1, 0], sizes = [1, 128], strides = [1, 1]} : vector<2x128xf32> to vector<1x128xf32>
    %10 = vector.broadcast %8 : vector<50x1xf32> to vector<50x128xf32>
    %11 = vector.broadcast %9 : vector<1x128xf32> to vector<50x128xf32>
    %12 = arith.mulf %10, %11 : vector<50x128xf32>
    %13 = arith.addf %6, %12 : vector<50x128xf32>
    %c0_6 = arith.constant 0 : index
    %c0_7 = arith.constant 0 : index
    %c0_8 = arith.constant 0 : index
    %14 = vector.load %arg3[%c0_6, %c0_7, %c0_8] : memref<6x56x1xf32, #tpu.memory_space<vmem>>, vector<1x50x1xf32>
    %15 = vector.shape_cast %14 : vector<1x50x1xf32> to vector<50x1xf32>
    %16 = vector.broadcast %15 : vector<50x1xf32> to vector<50x128xf32>
    %17 = arith.addf %13, %16 : vector<50x128xf32>
    %cst = arith.constant 0.000000e+00 : f32
    %18 = vector.broadcast %cst : f32 to vector<50x128xf32>
    %19 = arith.maximumf %17, %18 : vector<50x128xf32>
    %c1_9 = arith.constant 1 : index
    %c0_10 = arith.constant 0 : index
    %c0_11 = arith.constant 0 : index
    %20 = vector.load %arg2[%c1_9, %c0_10, %c0_11] : memref<6x56x128xf32, #tpu.memory_space<vmem>>, vector<1x50x50xf32>
    %21 = vector.shape_cast %20 : vector<1x50x50xf32> to vector<50x50xf32>
    %c1_12 = arith.constant 1 : index
    %c0_13 = arith.constant 0 : index
    %c0_14 = arith.constant 0 : index
    %22 = vector.load %arg3[%c1_12, %c0_13, %c0_14] : memref<6x56x1xf32, #tpu.memory_space<vmem>>, vector<1x50x1xf32>
    %23 = vector.shape_cast %22 : vector<1x50x1xf32> to vector<50x1xf32>
    %cst_15 = arith.constant dense<0.000000e+00> : vector<50x128xf32>
    %24 = tpu.matmul %21, %19, %cst_15 {dimension_numbers = #tpu.dot_dimension_numbers<[1], [0], [0], [1], [0, 0, 1, 1], [], []>} : vector<50x50xf32>, vector<50x128xf32>, vector<50x128xf32> -> vector<50x128xf32>
    %25 = vector.broadcast %23 : vector<50x1xf32> to vector<50x128xf32>
    %26 = arith.addf %24, %25 : vector<50x128xf32>
    %cst_16 = arith.constant 0.000000e+00 : f32
    %27 = vector.broadcast %cst_16 : f32 to vector<50x128xf32>
    %28 = arith.maximumf %26, %27 : vector<50x128xf32>
    %c2 = arith.constant 2 : index
    %c0_17 = arith.constant 0 : index
    %c0_18 = arith.constant 0 : index
    %29 = vector.load %arg2[%c2, %c0_17, %c0_18] : memref<6x56x128xf32, #tpu.memory_space<vmem>>, vector<1x50x50xf32>
    %30 = vector.shape_cast %29 : vector<1x50x50xf32> to vector<50x50xf32>
    %c2_19 = arith.constant 2 : index
    %c0_20 = arith.constant 0 : index
    %c0_21 = arith.constant 0 : index
    %31 = vector.load %arg3[%c2_19, %c0_20, %c0_21] : memref<6x56x1xf32, #tpu.memory_space<vmem>>, vector<1x50x1xf32>
    %32 = vector.shape_cast %31 : vector<1x50x1xf32> to vector<50x1xf32>
    %cst_22 = arith.constant dense<0.000000e+00> : vector<50x128xf32>
    %33 = tpu.matmul %30, %28, %cst_22 {dimension_numbers = #tpu.dot_dimension_numbers<[1], [0], [0], [1], [0, 0, 1, 1], [], []>} : vector<50x50xf32>, vector<50x128xf32>, vector<50x128xf32> -> vector<50x128xf32>
    %34 = vector.broadcast %32 : vector<50x1xf32> to vector<50x128xf32>
    %35 = arith.addf %33, %34 : vector<50x128xf32>
    %cst_23 = arith.constant 0.000000e+00 : f32
    %36 = vector.broadcast %cst_23 : f32 to vector<50x128xf32>
    %37 = arith.maximumf %35, %36 : vector<50x128xf32>
    %c3 = arith.constant 3 : index
    %c0_24 = arith.constant 0 : index
    %c0_25 = arith.constant 0 : index
    %38 = vector.load %arg2[%c3, %c0_24, %c0_25] : memref<6x56x128xf32, #tpu.memory_space<vmem>>, vector<1x50x50xf32>
    %39 = vector.shape_cast %38 : vector<1x50x50xf32> to vector<50x50xf32>
    %c3_26 = arith.constant 3 : index
    %c0_27 = arith.constant 0 : index
    %c0_28 = arith.constant 0 : index
    %40 = vector.load %arg3[%c3_26, %c0_27, %c0_28] : memref<6x56x1xf32, #tpu.memory_space<vmem>>, vector<1x50x1xf32>
    %41 = vector.shape_cast %40 : vector<1x50x1xf32> to vector<50x1xf32>
    %cst_29 = arith.constant dense<0.000000e+00> : vector<50x128xf32>
    %42 = tpu.matmul %39, %37, %cst_29 {dimension_numbers = #tpu.dot_dimension_numbers<[1], [0], [0], [1], [0, 0, 1, 1], [], []>} : vector<50x50xf32>, vector<50x128xf32>, vector<50x128xf32> -> vector<50x128xf32>
    %43 = vector.broadcast %41 : vector<50x1xf32> to vector<50x128xf32>
    %44 = arith.addf %42, %43 : vector<50x128xf32>
    %cst_30 = arith.constant 0.000000e+00 : f32
    %45 = vector.broadcast %cst_30 : f32 to vector<50x128xf32>
    %46 = arith.maximumf %44, %45 : vector<50x128xf32>
    %c4 = arith.constant 4 : index
    %c0_31 = arith.constant 0 : index
    %c0_32 = arith.constant 0 : index
    %47 = vector.load %arg2[%c4, %c0_31, %c0_32] : memref<6x56x128xf32, #tpu.memory_space<vmem>>, vector<1x50x50xf32>
    %48 = vector.shape_cast %47 : vector<1x50x50xf32> to vector<50x50xf32>
    %c4_33 = arith.constant 4 : index
    %c0_34 = arith.constant 0 : index
    %c0_35 = arith.constant 0 : index
    %49 = vector.load %arg3[%c4_33, %c0_34, %c0_35] : memref<6x56x1xf32, #tpu.memory_space<vmem>>, vector<1x50x1xf32>
    %50 = vector.shape_cast %49 : vector<1x50x1xf32> to vector<50x1xf32>
    %cst_36 = arith.constant dense<0.000000e+00> : vector<50x128xf32>
    %51 = tpu.matmul %48, %46, %cst_36 {dimension_numbers = #tpu.dot_dimension_numbers<[1], [0], [0], [1], [0, 0, 1, 1], [], []>} : vector<50x50xf32>, vector<50x128xf32>, vector<50x128xf32> -> vector<50x128xf32>
    %52 = vector.broadcast %50 : vector<50x1xf32> to vector<50x128xf32>
    %53 = arith.addf %51, %52 : vector<50x128xf32>
    %cst_37 = arith.constant 0.000000e+00 : f32
    %54 = vector.broadcast %cst_37 : f32 to vector<50x128xf32>
    %55 = arith.maximumf %53, %54 : vector<50x128xf32>
    %c5 = arith.constant 5 : index
    %c0_38 = arith.constant 0 : index
    %c0_39 = arith.constant 0 : index
    %56 = vector.load %arg2[%c5, %c0_38, %c0_39] : memref<6x56x128xf32, #tpu.memory_space<vmem>>, vector<1x50x1xf32>
    %57 = vector.shape_cast %56 : vector<1x50x1xf32> to vector<50x1xf32>
    %c5_40 = arith.constant 5 : index
    %c0_41 = arith.constant 0 : index
    %c0_42 = arith.constant 0 : index
    %58 = vector.load %arg3[%c5_40, %c0_41, %c0_42] : memref<6x56x1xf32, #tpu.memory_space<vmem>>, vector<1x1x1xf32>
    %59 = vector.shape_cast %58 : vector<1x1x1xf32> to vector<1x1xf32>
    %60 = vector.broadcast %57 : vector<50x1xf32> to vector<50x128xf32>
    %61 = arith.mulf %60, %55 : vector<50x128xf32>
    %cst_43 = arith.constant dense<0.000000e+00> : vector<128xf32>
    %62 = vector.multi_reduction <add>, %61, %cst_43 [0] : vector<50x128xf32> to vector<128xf32>
    %63 = vector.shape_cast %62 : vector<128xf32> to vector<1x128xf32>
    %64 = vector.broadcast %59 : vector<1x1xf32> to vector<1x128xf32>
    %65 = arith.addf %63, %64 : vector<1x128xf32>
    %c0_44 = arith.constant 0 : index
    %c0_45 = arith.constant 0 : index
    %66 = vector.load %arg4[%c0_44, %c0_45] : memref<1x128xf32, #tpu.memory_space<vmem>>, vector<1x128xf32>
    tpu.vector_store %arg4[%c0_44, %c0_45], %65 {strides = array<i32>} : memref<1x128xf32, #tpu.memory_space<vmem>>, vector<1x128xf32>,
    return
  }
  func.func @transform_0(%arg0: i32) -> (i32, i32) {
    %c0_i32 = arith.constant 0 : i32
    %c0_i32_0 = arith.constant 0 : i32
    return %c0_i32, %arg0 : i32, i32
  }
  func.func @transform_1(%arg0: i32) -> (i32, i32, i32) {
    %c0_i32 = arith.constant 0 : i32
    %c0_i32_0 = arith.constant 0 : i32
    %c0_i32_1 = arith.constant 0 : i32
    %c0_i32_2 = arith.constant 0 : i32
    return %c0_i32, %c0_i32_0, %c0_i32_1 : i32, i32, i32
  }
  func.func @transform_2(%arg0: i32) -> (i32, i32, i32) {
    %c0_i32 = arith.constant 0 : i32
    %c0_i32_0 = arith.constant 0 : i32
    %c0_i32_1 = arith.constant 0 : i32
    %c0_i32_2 = arith.constant 0 : i32
    return %c0_i32, %c0_i32_0, %c0_i32_1 : i32, i32, i32
  }
  func.func @transform_3(%arg0: i32) -> (i32, i32) {
    %c0_i32 = arith.constant 0 : i32
    %c0_i32_0 = arith.constant 0 : i32
    return %c0_i32, %arg0 : i32, i32
  }
}

</mosaic_0001>

<llo_original>
// kernel: tpu_custom_call.1
$region0: #{tpu_custom_call.1}
  #allocation0 [shape = 'u32[]', space=smem, size = 0x4, offset = 0x4, fixed_abs, tag = 'smem constant byte address 0x4 - core index']
  #allocation1 [shape = 'u32[144,128]{1,0:T(1,128)}', space=vmem, size = 0x12000, scoped, tag = 'internal scratch']
  %s0 = inlined_call_operand.vmem [shape: f32[2,128], index: 0, kind: input, shape index: {}]
  %s1 = inlined_call_operand.vmem [shape: f32[6,56,128], index: 1, kind: input, shape index: {}]
  %s2 = inlined_call_operand.vmem [shape: f32[6,56,1], index: 2, kind: input, shape index: {}]
  %s3 = inlined_call_operand.hbm [shape: f32[1,128], index: 3, kind: output, shape index: {}]
  %s4 = sld [smem:[#allocation0]]
  $region22: #{tpu_custom_call.1} parent=0
    _
  %s6 = ssub.s32 1, %s4
  %s7 = scalar_select 0, %s6, %s4
  $region1: #{tpu_custom_call.1} parent=0
    #allocation2 [shape = 'u8[512]{0}', space=vmem, size = 0x400, scoped, tag = 'output window, operand 0, single buffered']
    #allocation3 [shape = 's32[1]{0}', space=sflag, size = 0x4, scoped, tag = 'scoped memory for tpu_custom_call.1']
    %8 = vsyncpa [#allocation3], 0
    // Predicated region
    $region2: #{tpu_custom_call.1} parent=1 // pred_check
      _
    $region3: #{tpu_custom_call.1} parent=1 // pred_check_branch
      %10 = sbr.rel (0) target = $region5
    $region4: #{tpu_custom_call.1} parent=1 // pred_region
      _
    $region5: #{tpu_custom_call.1} parent=1 // pred_fallthru
      _
    // Predicated region
    $region6: #{tpu_custom_call.1} parent=1 // pred_check
      _
    $region7: #{tpu_custom_call.1} parent=1 // pred_check_branch
      %12 = sbr.rel (0) target = $region9
    $region8: #{tpu_custom_call.1} parent=1 // pred_region
      _
    $region9: #{tpu_custom_call.1} parent=1 // pred_fallthru
      _
    // Predicated region
    $region10: #{tpu_custom_call.1} parent=1 // pred_check
      _
    $region11: #{tpu_custom_call.1} parent=1 // pred_check_branch
      %14 = sbr.rel (0) target = $region13
    $region12: #{tpu_custom_call.1} parent=1 // pred_region
      _
    $region13: #{tpu_custom_call.1} parent=1 // pred_fallthru
      _
    %v15 = vld [vmem:[%s0] sm:$0x3]
    %v16 = vld [vmem:[%s1] sm:$0xff]
    %v17 = vld [vmem:[%s1 + $0x8] sm:$0xff]
    %v18 = vld [vmem:[%s1 + $0x10] sm:$0xff]
    %v19 = vld [vmem:[%s1 + $0x18] sm:$0xff]
    %v20 = vld [vmem:[%s1 + $0x20] sm:$0xff]
    %v21 = vld [vmem:[%s1 + $0x28] sm:$0xff]
    %v22 = vld [vmem:[%s1 + $0x30] sm:$0x3]
    %24 = vset.pattern.permute.xlu0 0
    %25 = vperm.xlu0 %24, %v16
    %v26 = vpop.permute.xlu0 %25
    %29 = vset.pattern.permute.xlu0 0
    %30 = vperm.xlu0 %29, %v17
    %v31 = vpop.permute.xlu0 %30
    %34 = vset.pattern.permute.xlu0 0
    %35 = vperm.xlu0 %34, %v18
    %v36 = vpop.permute.xlu0 %35
    %39 = vset.pattern.permute.xlu0 0
    %40 = vperm.xlu0 %39, %v19
    %v41 = vpop.permute.xlu0 %40
    %44 = vset.pattern.permute.xlu0 0
    %45 = vperm.xlu0 %44, %v20
    %v46 = vpop.permute.xlu0 %45
    %49 = vset.pattern.permute.xlu0 0
    %50 = vperm.xlu0 %49, %v21
    %v51 = vpop.permute.xlu0 %50
    %54 = vset.pattern.permute.xlu0 0
    %55 = vperm.xlu0 %54, %v22
    %v56 = vpop.permute.xlu0 %55
    %v58 = vlaneseq
    %v59 = vshrl.u32 %v58, 7
    %v60 = vsub.s32 0, %v59
    %v61 = vrot.slane %v15, %v60
    %v62 = vmul.f32 %v26, %v61
    %v63 = vmul.f32 %v31, %v61
    %v64 = vmul.f32 %v36, %v61
    %v65 = vmul.f32 %v41, %v61
    %v66 = vmul.f32 %v46, %v61
    %v67 = vmul.f32 %v51, %v61
    %v68 = vmul.f32 %v56, %v61
    %69 = vset.pattern.permute.xlu0 1
    %70 = vperm.xlu0 %69, %v16
    %v71 = vpop.permute.xlu0 %70
    %73 = vset.pattern.permute.xlu0 1
    %74 = vperm.xlu0 %73, %v17
    %v75 = vpop.permute.xlu0 %74
    %77 = vset.pattern.permute.xlu0 1
    %78 = vperm.xlu0 %77, %v18
    %v79 = vpop.permute.xlu0 %78
    %81 = vset.pattern.permute.xlu0 1
    %82 = vperm.xlu0 %81, %v19
    %v83 = vpop.permute.xlu0 %82
    %85 = vset.pattern.permute.xlu0 1
    %86 = vperm.xlu0 %85, %v20
    %v87 = vpop.permute.xlu0 %86
    %89 = vset.pattern.permute.xlu0 1
    %90 = vperm.xlu0 %89, %v21
    %v91 = vpop.permute.xlu0 %90
    %93 = vset.pattern.permute.xlu0 1
    %94 = vperm.xlu0 %93, %v22
    %v95 = vpop.permute.xlu0 %94
    %v97 = vlaneseq
    %v98 = vshrl.u32 %v97, 7
    %v99 = vsub.s32 1, %v98
    %v100 = vrot.slane %v15, %v99
    %v101 = vmul.f32 %v71, %v100
    %v102 = vmul.f32 %v75, %v100
    %v103 = vmul.f32 %v79, %v100
    %v104 = vmul.f32 %v83, %v100
    %v105 = vmul.f32 %v87, %v100
    %v106 = vmul.f32 %v91, %v100
    %v107 = vmul.f32 %v95, %v100
    %v108 = vadd.f32 %v62, %v101
    %v109 = vadd.f32 %v63, %v102
    %v110 = vadd.f32 %v64, %v103
    %v111 = vadd.f32 %v65, %v104
    %v112 = vadd.f32 %v66, %v105
    %v113 = vadd.f32 %v67, %v106
    %v114 = vadd.f32 %v68, %v107
    %v115 = vld [vmem:[%s2] sm:$0xff]
    %v116 = vld [vmem:[%s2 + $0x8] sm:$0xff]
    %v117 = vld [vmem:[%s2 + $0x10] sm:$0xff]
    %v118 = vld [vmem:[%s2 + $0x18] sm:$0xff]
    %v119 = vld [vmem:[%s2 + $0x20] sm:$0xff]
    %v120 = vld [vmem:[%s2 + $0x28] sm:$0xff]
    %v121 = vld [vmem:[%s2 + $0x30] sm:$0x3]
    %123 = vset.pattern.permute.xlu0 0
    %124 = vperm.xlu0 %123, %v115
    %v125 = vpop.permute.xlu0 %124
    %128 = vset.pattern.permute.xlu0 0
    %129 = vperm.xlu0 %128, %v116
    %v130 = vpop.permute.xlu0 %129
    %133 = vset.pattern.permute.xlu0 0
    %134 = vperm.xlu0 %133, %v117
    %v135 = vpop.permute.xlu0 %134
    %138 = vset.pattern.permute.xlu0 0
    %139 = vperm.xlu0 %138, %v118
    %v140 = vpop.permute.xlu0 %139
    %143 = vset.pattern.permute.xlu0 0
    %144 = vperm.xlu0 %143, %v119
    %v145 = vpop.permute.xlu0 %144
    %148 = vset.pattern.permute.xlu0 0
    %149 = vperm.xlu0 %148, %v120
    %v150 = vpop.permute.xlu0 %149
    %153 = vset.pattern.permute.xlu0 0
    %154 = vperm.xlu0 %153, %v121
    %v155 = vpop.permute.xlu0 %154
    %v157 = vadd.f32 %v108, %v125
    %v158 = vadd.f32 %v109, %v130
    %v159 = vadd.f32 %v110, %v135
    %v160 = vadd.f32 %v111, %v140
    %v161 = vadd.f32 %v112, %v145
    %v162 = vadd.f32 %v113, %v150
    %v163 = vadd.f32 %v114, %v155
    %v164 = vmax.f32 %v157, 0.0
    %v165 = vmax.f32 %v158, 0.0
    %v166 = vmax.f32 %v159, 0.0
    %v167 = vmax.f32 %v160, 0.0
    %v168 = vmax.f32 %v161, 0.0
    %v169 = vmax.f32 %v162, 0.0
    %v170 = vmax.f32 %v163, 0.0
    %s171 = scalar_lea.vmem %s1, 56
    %v172 = vld [vmem:[%s171] sm:$0xff]
    %v173 = vld [vmem:[%s171 + $0x8] sm:$0xff]
    %v174 = vld [vmem:[%s171 + $0x10] sm:$0xff]
    %v175 = vld [vmem:[%s171 + $0x18] sm:$0xff]
    %v176 = vld [vmem:[%s171 + $0x20] sm:$0xff]
    %v177 = vld [vmem:[%s171 + $0x28] sm:$0xff]
    %v178 = vld [vmem:[%s171 + $0x30] sm:$0x3]
    %s179 = scalar_lea.vmem %s2, 56
    %v180 = vld [vmem:[%s179] sm:$0xff]
    %v181 = vld [vmem:[%s179 + $0x8] sm:$0xff]
    %v182 = vld [vmem:[%s179 + $0x10] sm:$0xff]
    %v183 = vld [vmem:[%s179 + $0x18] sm:$0xff]
    %v184 = vld [vmem:[%s179 + $0x20] sm:$0xff]
    %v185 = vld [vmem:[%s179 + $0x28] sm:$0xff]
    %v186 = vld [vmem:[%s179 + $0x30] sm:$0x3]
    %188 = vset.pattern.permute.xlu0 0
    %189 = vperm.xlu0 %188, %v180
    %v190 = vpop.permute.xlu0 %189
    %193 = vset.pattern.permute.xlu0 0
    %194 = vperm.xlu0 %193, %v181
    %v195 = vpop.permute.xlu0 %194
    %198 = vset.pattern.permute.xlu0 0
    %199 = vperm.xlu0 %198, %v182
    %v200 = vpop.permute.xlu0 %199
    %203 = vset.pattern.permute.xlu0 0
    %204 = vperm.xlu0 %203, %v183
    %v205 = vpop.permute.xlu0 %204
    %208 = vset.pattern.permute.xlu0 0
    %209 = vperm.xlu0 %208, %v184
    %v210 = vpop.permute.xlu0 %209
    %213 = vset.pattern.permute.xlu0 0
    %214 = vperm.xlu0 %213, %v185
    %v215 = vpop.permute.xlu0 %214
    %218 = vset.pattern.permute.xlu0 0
    %219 = vperm.xlu0 %218, %v186
    %v220 = vpop.permute.xlu0 %219
    %vm222 = vcmask 408576
    %v224 = vsel %vm222, %v172, 0
    %v227 = vsel %vm222, %v173, 0
    %v230 = vsel %vm222, %v174, 0
    %v233 = vsel %vm222, %v175, 0
    %v236 = vsel %vm222, %v176, 0
    %v239 = vsel %vm222, %v177, 0
    %v242 = vsel %vm222, %v178, 0
    %vm244 = vcmask 1041408
    %v246 = vsel %vm244, %v170, 0
    %248 = vmatprep.subr.mxu0 0.0
    %249 = vmatpush1.msra.mxu0 %v164
    %250 = vmatprep.subr.mxu0 0.0
    %251 = vmatpush1.msra.mxu0 %v165
    %252 = vmatprep.subr.mxu0 0.0
    %253 = vmatpush1.msra.mxu0 %v166
    %254 = vmatprep.subr.mxu0 0.0
    %255 = vmatpush1.msra.mxu0 %v167
    %256 = vmatprep.subr.mxu0 0.0
    %257 = vmatpush1.msra.mxu0 %v168
    %258 = vmatprep.subr.mxu0 0.0
    %259 = vmatpush1.msra.mxu0 %v169
    %260 = vmatprep.subr.mxu0 0.0
    %261 = vmatpush1.msra.mxu0 %v246
    %262 = vmatprep.subr.mxu0 0.0
    %263 = vmatpush1.msra.mxu0 0.0
    %264 = vmatprep.subr.mxu0 0.0
    %265 = vmatpush1.msra.mxu0 0.0
    %266 = vmatprep.subr.mxu0 0.0
    %267 = vmatpush1.msra.mxu0 0.0
    %268 = vmatprep.subr.mxu0 0.0
    %269 = vmatpush1.msra.mxu0 0.0
    %270 = vmatprep.subr.mxu0 0.0
    %271 = vmatpush1.msra.mxu0 0.0
    %272 = vmatprep.subr.mxu0 0.0
    %273 = vmatpush1.msra.mxu0 0.0
    %274 = vmatprep.subr.mxu0 0.0
    %275 = vmatpush1.msra.mxu0 0.0
    %276 = vmatprep.subr.mxu0 0.0
    %277 = vmatpush1.msra.mxu0 0.0
    %278 = vmatprep.subr.mxu0 0.0
    %279 = vmatpush1.msra.mxu0 0.0
    %280 = vmatprep.subr.mxu0 0.0
    %281 = vmatpush1.msra.mxu0 0.0
    %282 = vmatprep.subr.mxu0 0.0
    %283 = vmatpush1.msra.mxu0 0.0
    %284 = vmatprep.subr.mxu0 0.0
    %285 = vmatpush1.msra.mxu0 0.0
    %286 = vmatprep.subr.mxu0 0.0
    %287 = vmatpush1.msra.mxu0 0.0
    %288 = vmatprep.subr.mxu0 0.0
    %289 = vmatpush1.msra.mxu0 0.0
    %290 = vmatprep.subr.mxu0 0.0
    %291 = vmatpush1.msra.mxu0 0.0
    %292 = vmatprep.subr.mxu0 0.0
    %293 = vmatpush1.msra.mxu0 0.0
    %294 = vmatprep.subr.mxu0 0.0
    %295 = vmatpush1.msra.mxu0 0.0
    %296 = vmatprep.subr.mxu0 0.0
    %297 = vmatpush1.msra.mxu0 0.0
    %298 = vmatprep.subr.mxu0 0.0
    %299 = vmatpush1.msra.mxu0 0.0
    %300 = vmatprep.subr.mxu0 0.0
    %301 = vmatpush1.msra.mxu0 0.0
    %302 = vmatprep.subr.mxu0 0.0
    %303 = vmatpush1.msra.mxu0 0.0
    %304 = vmatprep.subr.mxu0 0.0
    %305 = vmatpush1.msra.mxu0 0.0
    %306 = vmatprep.subr.mxu0 0.0
    %307 = vmatpush1.msra.mxu0 0.0
    %308 = vmatprep.subr.mxu0 0.0
    %309 = vmatpush1.msra.mxu0 0.0
    %310 = vmatprep.subr.mxu0 0.0
    %311 = vmatpush1.msra.mxu0 0.0
    %312 = vmatprep.mubr.f32.mxu0 0.0
    %313 = vmatmul.mubr.f32.gmra.mrb[0].mxu0 %v224
    %v314 = vpop.f32.mrb[0].mxu0
    %v315 = vadd.f32 %v190, %v314
    %v316 = vpop.f32.mrb[0].mxu0
    %317 = vmatprep.mubr.f32.mxu0 0.0
    %318 = vmatmul.mubr.f32.gmra.mrb[0].mxu0 %v227
    %v319 = vpop.f32.mrb[0].mxu0
    %v320 = vadd.f32 %v195, %v319
    %v321 = vpop.f32.mrb[0].mxu0
    %322 = vmatprep.mubr.f32.mxu0 0.0
    %323 = vmatmul.mubr.f32.gmra.mrb[0].mxu0 %v230
    %v324 = vpop.f32.mrb[0].mxu0
    %v325 = vadd.f32 %v200, %v324
    %v326 = vpop.f32.mrb[0].mxu0
    %327 = vmatprep.mubr.f32.mxu0 0.0
    %328 = vmatmul.mubr.f32.gmra.mrb[0].mxu0 %v233
    %v329 = vpop.f32.mrb[0].mxu0
    %v330 = vadd.f32 %v205, %v329
    %v331 = vpop.f32.mrb[0].mxu0
    %332 = vmatprep.mubr.f32.mxu0 0.0
    %333 = vmatmul.mubr.f32.gmra.mrb[0].mxu0 %v236
    %v334 = vpop.f32.mrb[0].mxu0
    %v335 = vadd.f32 %v210, %v334
    %v336 = vpop.f32.mrb[0].mxu0
    %337 = vmatprep.mubr.f32.mxu0 0.0
    %338 = vmatmul.mubr.f32.gmra.mrb[0].mxu0 %v239
    %v339 = vpop.f32.mrb[0].mxu0
    %v340 = vadd.f32 %v215, %v339
    %v341 = vpop.f32.mrb[0].mxu0
    %342 = vmatprep.mubr.f32.mxu0 0.0
    %343 = vmatmul.mubr.f32.gmra.mrb[0].mxu0 %v242
    %v344 = vpop.f32.mrb[0].mxu0
    %v345 = vadd.f32 %v220, %v344
    %v346 = vpop.f32.mrb[0].mxu0
    %347 = vdwg.mxu0
    %v348 = vmax.f32 %v315, 0.0
    %v349 = vmax.f32 %v320, 0.0
    %v350 = vmax.f32 %v325, 0.0
    %v351 = vmax.f32 %v330, 0.0
    %v352 = vmax.f32 %v335, 0.0
    %v353 = vmax.f32 %v340, 0.0
    %v354 = vmax.f32 %v345, 0.0
    %s355 = scalar_lea.vmem %s1, 112
    %v356 = vld [vmem:[%s355] sm:$0xff]
    %v357 = vld [vmem:[%s355 + $0x8] sm:$0xff]
    %v358 = vld [vmem:[%s355 + $0x10] sm:$0xff]
    %v359 = vld [vmem:[%s355 + $0x18] sm:$0xff]
    %v360 = vld [vmem:[%s355 + $0x20] sm:$0xff]
    %v361 = vld [vmem:[%s355 + $0x28] sm:$0xff]
    %v362 = vld [vmem:[%s355 + $0x30] sm:$0x3]
    %s363 = scalar_lea.vmem %s2, 112
    %v364 = vld [vmem:[%s363] sm:$0xff]
    %v365 = vld [vmem:[%s363 + $0x8] sm:$0xff]
    %v366 = vld [vmem:[%s363 + $0x10] sm:$0xff]
    %v367 = vld [vmem:[%s363 + $0x18] sm:$0xff]
    %v368 = vld [vmem:[%s363 + $0x20] sm:$0xff]
    %v369 = vld [vmem:[%s363 + $0x28] sm:$0xff]
    %v370 = vld [vmem:[%s363 + $0x30] sm:$0x3]
    %372 = vset.pattern.permute.xlu0 0
    %373 = vperm.xlu0 %372, %v364
    %v374 = vpop.permute.xlu0 %373
    %377 = vset.pattern.permute.xlu0 0
    %378 = vperm.xlu0 %377, %v365
    %v379 = vpop.permute.xlu0 %378
    %382 = vset.pattern.permute.xlu0 0
    %383 = vperm.xlu0 %382, %v366
    %v384 = vpop.permute.xlu0 %383
    %387 = vset.pattern.permute.xlu0 0
    %388 = vperm.xlu0 %387, %v367
    %v389 = vpop.permute.xlu0 %388
    %392 = vset.pattern.permute.xlu0 0
    %393 = vperm.xlu0 %392, %v368
    %v394 = vpop.permute.xlu0 %393
    %397 = vset.pattern.permute.xlu0 0
    %398 = vperm.xlu0 %397, %v369
    %v399 = vpop.permute.xlu0 %398
    %402 = vset.pattern.permute.xlu0 0
    %403 = vperm.xlu0 %402, %v370
    %v404 = vpop.permute.xlu0 %403
    %v407 = vsel %vm222, %v356, 0
    %v410 = vsel %vm222, %v357, 0
    %v413 = vsel %vm222, %v358, 0
    %v416 = vsel %vm222, %v359, 0
    %v419 = vsel %vm222, %v360, 0
    %v422 = vsel %vm222, %v361, 0
    %v425 = vsel %vm222, %v362, 0
    %v428 = vsel %vm244, %v354, 0
    %430 = vmatprep.subr.mxu0 0.0
    %431 = vmatpush1.msra.mxu0 %v348
    %432 = vmatprep.subr.mxu0 0.0
    %433 = vmatpush1.msra.mxu0 %v349
    %434 = vmatprep.subr.mxu0 0.0
    %435 = vmatpush1.msra.mxu0 %v350
    %436 = vmatprep.subr.mxu0 0.0
    %437 = vmatpush1.msra.mxu0 %v351
    %438 = vmatprep.subr.mxu0 0.0
    %439 = vmatpush1.msra.mxu0 %v352
    %440 = vmatprep.subr.mxu0 0.0
    %441 = vmatpush1.msra.mxu0 %v353
    %442 = vmatprep.subr.mxu0 0.0
    %443 = vmatpush1.msra.mxu0 %v428
    %444 = vmatprep.subr.mxu0 0.0
    %445 = vmatpush1.msra.mxu0 0.0
    %446 = vmatprep.subr.mxu0 0.0
    %447 = vmatpush1.msra.mxu0 0.0
    %448 = vmatprep.subr.mxu0 0.0
    %449 = vmatpush1.msra.mxu0 0.0
    %450 = vmatprep.subr.mxu0 0.0
    %451 = vmatpush1.msra.mxu0 0.0
    %452 = vmatprep.subr.mxu0 0.0
    %453 = vmatpush1.msra.mxu0 0.0
    %454 = vmatprep.subr.mxu0 0.0
    %455 = vmatpush1.msra.mxu0 0.0
    %456 = vmatprep.subr.mxu0 0.0
    %457 = vmatpush1.msra.mxu0 0.0
    %458 = vmatprep.subr.mxu0 0.0
    %459 = vmatpush1.msra.mxu0 0.0
    %460 = vmatprep.subr.mxu0 0.0
    %461 = vmatpush1.msra.mxu0 0.0
    %462 = vmatprep.subr.mxu0 0.0
    %463 = vmatpush1.msra.mxu0 0.0
    %464 = vmatprep.subr.mxu0 0.0
    %465 = vmatpush1.msra.mxu0 0.0
    %466 = vmatprep.subr.mxu0 0.0
    %467 = vmatpush1.msra.mxu0 0.0
    %468 = vmatprep.subr.mxu0 0.0
    %469 = vmatpush1.msra.mxu0 0.0
    %470 = vmatprep.subr.mxu0 0.0
    %471 = vmatpush1.msra.mxu0 0.0
    %472 = vmatprep.subr.mxu0 0.0
    %473 = vmatpush1.msra.mxu0 0.0
    %474 = vmatprep.subr.mxu0 0.0
    %475 = vmatpush1.msra.mxu0 0.0
    %476 = vmatprep.subr.mxu0 0.0
    %477 = vmatpush1.msra.mxu0 0.0
    %478 = vmatprep.subr.mxu0 0.0
    %479 = vmatpush1.msra.mxu0 0.0
    %480 = vmatprep.subr.mxu0 0.0
    %481 = vmatpush1.msra.mxu0 0.0
    %482 = vmatprep.subr.mxu0 0.0
    %483 = vmatpush1.msra.mxu0 0.0
    %484 = vmatprep.subr.mxu0 0.0
    %485 = vmatpush1.msra.mxu0 0.0
    %486 = vmatprep.subr.mxu0 0.0
    %487 = vmatpush1.msra.mxu0 0.0
    %488 = vmatprep.subr.mxu0 0.0
    %489 = vmatpush1.msra.mxu0 0.0
    %490 = vmatprep.subr.mxu0 0.0
    %491 = vmatpush1.msra.mxu0 0.0
    %492 = vmatprep.subr.mxu0 0.0
    %493 = vmatpush1.msra.mxu0 0.0
    %494 = vmatprep.mubr.f32.mxu0 0.0
    %495 = vmatmul.mubr.f32.gmra.mrb[0].mxu0 %v407
    %v496 = vpop.f32.mrb[0].mxu0
    %v497 = vadd.f32 %v374, %v496
    %v498 = vpop.f32.mrb[0].mxu0
    %499 = vmatprep.mubr.f32.mxu0 0.0
    %500 = vmatmul.mubr.f32.gmra.mrb[0].mxu0 %v410
    %v501 = vpop.f32.mrb[0].mxu0
    %v502 = vadd.f32 %v379, %v501
    %v503 = vpop.f32.mrb[0].mxu0
    %504 = vmatprep.mubr.f32.mxu0 0.0
    %505 = vmatmul.mubr.f32.gmra.mrb[0].mxu0 %v413
    %v506 = vpop.f32.mrb[0].mxu0
    %v507 = vadd.f32 %v384, %v506
    %v508 = vpop.f32.mrb[0].mxu0
    %509 = vmatprep.mubr.f32.mxu0 0.0
    %510 = vmatmul.mubr.f32.gmra.mrb[0].mxu0 %v416
    %v511 = vpop.f32.mrb[0].mxu0
    %v512 = vadd.f32 %v389, %v511
    %v513 = vpop.f32.mrb[0].mxu0
    %514 = vmatprep.mubr.f32.mxu0 0.0
    %515 = vmatmul.mubr.f32.gmra.mrb[0].mxu0 %v419
    %v516 = vpop.f32.mrb[0].mxu0
    %v517 = vadd.f32 %v394, %v516
    %v518 = vpop.f32.mrb[0].mxu0
    %519 = vmatprep.mubr.f32.mxu0 0.0
    %520 = vmatmul.mubr.f32.gmra.mrb[0].mxu0 %v422
    %v521 = vpop.f32.mrb[0].mxu0
    %v522 = vadd.f32 %v399, %v521
    %v523 = vpop.f32.mrb[0].mxu0
    %524 = vmatprep.mubr.f32.mxu0 0.0
    %525 = vmatmul.mubr.f32.gmra.mrb[0].mxu0 %v425
    %v526 = vpop.f32.mrb[0].mxu0
    %v527 = vadd.f32 %v404, %v526
    %v528 = vpop.f32.mrb[0].mxu0
    %529 = vdwg.mxu0
    %v530 = vmax.f32 %v497, 0.0
    %v531 = vmax.f32 %v502, 0.0
    %v532 = vmax.f32 %v507, 0.0
    %v533 = vmax.f32 %v512, 0.0
    %v534 = vmax.f32 %v517, 0.0
    %v535 = vmax.f32 %v522, 0.0
    %v536 = vmax.f32 %v527, 0.0
    %s537 = scalar_lea.vmem %s1, 168
    %v538 = vld [vmem:[%s537] sm:$0xff]
    %v539 = vld [vmem:[%s537 + $0x8] sm:$0xff]
    %v540 = vld [vmem:[%s537 + $0x10] sm:$0xff]
    %v541 = vld [vmem:[%s537 + $0x18] sm:$0xff]
    %v542 = vld [vmem:[%s537 + $0x20] sm:$0xff]
    %v543 = vld [vmem:[%s537 + $0x28] sm:$0xff]
    %v544 = vld [vmem:[%s537 + $0x30] sm:$0x3]
    %s545 = scalar_lea.vmem %s2, 168
    %v546 = vld [vmem:[%s545] sm:$0xff]
    %v547 = vld [vmem:[%s545 + $0x8] sm:$0xff]
    %v548 = vld [vmem:[%s545 + $0x10] sm:$0xff]
    %v549 = vld [vmem:[%s545 + $0x18] sm:$0xff]
    %v550 = vld [vmem:[%s545 + $0x20] sm:$0xff]
    %v551 = vld [vmem:[%s545 + $0x28] sm:$0xff]
    %v552 = vld [vmem:[%s545 + $0x30] sm:$0x3]
    %554 = vset.pattern.permute.xlu0 0
    %555 = vperm.xlu0 %554, %v546
    %v556 = vpop.permute.xlu0 %555
    %559 = vset.pattern.permute.xlu0 0
    %560 = vperm.xlu0 %559, %v547
    %v561 = vpop.permute.xlu0 %560
    %564 = vset.pattern.permute.xlu0 0
    %565 = vperm.xlu0 %564, %v548
    %v566 = vpop.permute.xlu0 %565
    %569 = vset.pattern.permute.xlu0 0
    %570 = vperm.xlu0 %569, %v549
    %v571 = vpop.permute.xlu0 %570
    %574 = vset.pattern.permute.xlu0 0
    %575 = vperm.xlu0 %574, %v550
    %v576 = vpop.permute.xlu0 %575
    %579 = vset.pattern.permute.xlu0 0
    %580 = vperm.xlu0 %579, %v551
    %v581 = vpop.permute.xlu0 %580
    %584 = vset.pattern.permute.xlu0 0
    %585 = vperm.xlu0 %584, %v552
    %v586 = vpop.permute.xlu0 %585
    %v589 = vsel %vm222, %v538, 0
    %v592 = vsel %vm222, %v539, 0
    %v595 = vsel %vm222, %v540, 0
    %v598 = vsel %vm222, %v541, 0
    %v601 = vsel %vm222, %v542, 0
    %v604 = vsel %vm222, %v543, 0
    %v607 = vsel %vm222, %v544, 0
    %v610 = vsel %vm244, %v536, 0
    %612 = vmatprep.subr.mxu0 0.0
    %613 = vmatpush1.msra.mxu0 %v530
    %614 = vmatprep.subr.mxu0 0.0
    %615 = vmatpush1.msra.mxu0 %v531
    %616 = vmatprep.subr.mxu0 0.0
    %617 = vmatpush1.msra.mxu0 %v532
    %618 = vmatprep.subr.mxu0 0.0
    %619 = vmatpush1.msra.mxu0 %v533
    %620 = vmatprep.subr.mxu0 0.0
    %621 = vmatpush1.msra.mxu0 %v534
    %622 = vmatprep.subr.mxu0 0.0
    %623 = vmatpush1.msra.mxu0 %v535
    %624 = vmatprep.subr.mxu0 0.0
    %625 = vmatpush1.msra.mxu0 %v610
    %626 = vmatprep.subr.mxu0 0.0
    %627 = vmatpush1.msra.mxu0 0.0
    %628 = vmatprep.subr.mxu0 0.0
    %629 = vmatpush1.msra.mxu0 0.0
    %630 = vmatprep.subr.mxu0 0.0
    %631 = vmatpush1.msra.mxu0 0.0
    %632 = vmatprep.subr.mxu0 0.0
    %633 = vmatpush1.msra.mxu0 0.0
    %634 = vmatprep.subr.mxu0 0.0
    %635 = vmatpush1.msra.mxu0 0.0
    %636 = vmatprep.subr.mxu0 0.0
    %637 = vmatpush1.msra.mxu0 0.0
    %638 = vmatprep.subr.mxu0 0.0
    %639 = vmatpush1.msra.mxu0 0.0
    %640 = vmatprep.subr.mxu0 0.0
    %641 = vmatpush1.msra.mxu0 0.0
    %642 = vmatprep.subr.mxu0 0.0
    %643 = vmatpush1.msra.mxu0 0.0
    %644 = vmatprep.subr.mxu0 0.0
    %645 = vmatpush1.msra.mxu0 0.0
    %646 = vmatprep.subr.mxu0 0.0
    %647 = vmatpush1.msra.mxu0 0.0
    %648 = vmatprep.subr.mxu0 0.0
    %649 = vmatpush1.msra.mxu0 0.0
    %650 = vmatprep.subr.mxu0 0.0
    %651 = vmatpush1.msra.mxu0 0.0
    %652 = vmatprep.subr.mxu0 0.0
    %653 = vmatpush1.msra.mxu0 0.0
    %654 = vmatprep.subr.mxu0 0.0
    %655 = vmatpush1.msra.mxu0 0.0
    %656 = vmatprep.subr.mxu0 0.0
    %657 = vmatpush1.msra.mxu0 0.0
    %658 = vmatprep.subr.mxu0 0.0
    %659 = vmatpush1.msra.mxu0 0.0
    %660 = vmatprep.subr.mxu0 0.0
    %661 = vmatpush1.msra.mxu0 0.0
    %662 = vmatprep.subr.mxu0 0.0
    %663 = vmatpush1.msra.mxu0 0.0
    %664 = vmatprep.subr.mxu0 0.0
    %665 = vmatpush1.msra.mxu0 0.0
    %666 = vmatprep.subr.mxu0 0.0
    %667 = vmatpush1.msra.mxu0 0.0
    %668 = vmatprep.subr.mxu0 0.0
    %669 = vmatpush1.msra.mxu0 0.0
    %670 = vmatprep.subr.mxu0 0.0
    %671 = vmatpush1.msra.mxu0 0.0
    %672 = vmatprep.subr.mxu0 0.0
    %673 = vmatpush1.msra.mxu0 0.0
    %674 = vmatprep.subr.mxu0 0.0
    %675 = vmatpush1.msra.mxu0 0.0
    %676 = vmatprep.mubr.f32.mxu0 0.0
    %677 = vmatmul.mubr.f32.gmra.mrb[0].mxu0 %v589
    %v678 = vpop.f32.mrb[0].mxu0
    %v679 = vadd.f32 %v556, %v678
    %v680 = vpop.f32.mrb[0].mxu0
    %681 = vmatprep.mubr.f32.mxu0 0.0
    %682 = vmatmul.mubr.f32.gmra.mrb[0].mxu0 %v592
    %v683 = vpop.f32.mrb[0].mxu0
    %v684 = vadd.f32 %v561, %v683
    %v685 = vpop.f32.mrb[0].mxu0
    %686 = vmatprep.mubr.f32.mxu0 0.0
    %687 = vmatmul.mubr.f32.gmra.mrb[0].mxu0 %v595
    %v688 = vpop.f32.mrb[0].mxu0
    %v689 = vadd.f32 %v566, %v688
    %v690 = vpop.f32.mrb[0].mxu0
    %691 = vmatprep.mubr.f32.mxu0 0.0
    %692 = vmatmul.mubr.f32.gmra.mrb[0].mxu0 %v598
    %v693 = vpop.f32.mrb[0].mxu0
    %v694 = vadd.f32 %v571, %v693
    %v695 = vpop.f32.mrb[0].mxu0
    %696 = vmatprep.mubr.f32.mxu0 0.0
    %697 = vmatmul.mubr.f32.gmra.mrb[0].mxu0 %v601
    %v698 = vpop.f32.mrb[0].mxu0
    %v699 = vadd.f32 %v576, %v698
    %v700 = vpop.f32.mrb[0].mxu0
    %701 = vmatprep.mubr.f32.mxu0 0.0
    %702 = vmatmul.mubr.f32.gmra.mrb[0].mxu0 %v604
    %v703 = vpop.f32.mrb[0].mxu0
    %v704 = vadd.f32 %v581, %v703
    %v705 = vpop.f32.mrb[0].mxu0
    %706 = vmatprep.mubr.f32.mxu0 0.0
    %707 = vmatmul.mubr.f32.gmra.mrb[0].mxu0 %v607
    %v708 = vpop.f32.mrb[0].mxu0
    %v709 = vadd.f32 %v586, %v708
    %v710 = vpop.f32.mrb[0].mxu0
    %711 = vdwg.mxu0
    %v712 = vmax.f32 %v679, 0.0
    %v713 = vmax.f32 %v684, 0.0
    %v714 = vmax.f32 %v689, 0.0
    %v715 = vmax.f32 %v694, 0.0
    %v716 = vmax.f32 %v699, 0.0
    %v717 = vmax.f32 %v704, 0.0
    %v718 = vmax.f32 %v709, 0.0
    %s719 = scalar_lea.vmem %s1, 224
    %v720 = vld [vmem:[%s719] sm:$0xff]
    %v721 = vld [vmem:[%s719 + $0x8] sm:$0xff]
    %v722 = vld [vmem:[%s719 + $0x10] sm:$0xff]
    %v723 = vld [vmem:[%s719 + $0x18] sm:$0xff]
    %v724 = vld [vmem:[%s719 + $0x20] sm:$0xff]
    %v725 = vld [vmem:[%s719 + $0x28] sm:$0xff]
    %v726 = vld [vmem:[%s719 + $0x30] sm:$0x3]
    %s727 = scalar_lea.vmem %s2, 224
    %v728 = vld [vmem:[%s727] sm:$0xff]
    %v729 = vld [vmem:[%s727 + $0x8] sm:$0xff]
    %v730 = vld [vmem:[%s727 + $0x10] sm:$0xff]
    %v731 = vld [vmem:[%s727 + $0x18] sm:$0xff]
    %v732 = vld [vmem:[%s727 + $0x20] sm:$0xff]
    %v733 = vld [vmem:[%s727 + $0x28] sm:$0xff]
    %v734 = vld [vmem:[%s727 + $0x30] sm:$0x3]
    %736 = vset.pattern.permute.xlu0 0
    %737 = vperm.xlu0 %736, %v728
    %v738 = vpop.permute.xlu0 %737
    %741 = vset.pattern.permute.xlu0 0
    %742 = vperm.xlu0 %741, %v729
    %v743 = vpop.permute.xlu0 %742
    %746 = vset.pattern.permute.xlu0 0
    %747 = vperm.xlu0 %746, %v730
    %v748 = vpop.permute.xlu0 %747
    %751 = vset.pattern.permute.xlu0 0
    %752 = vperm.xlu0 %751, %v731
    %v753 = vpop.permute.xlu0 %752
    %756 = vset.pattern.permute.xlu0 0
    %757 = vperm.xlu0 %756, %v732
    %v758 = vpop.permute.xlu0 %757
    %761 = vset.pattern.permute.xlu0 0
    %762 = vperm.xlu0 %761, %v733
    %v763 = vpop.permute.xlu0 %762
    %766 = vset.pattern.permute.xlu0 0
    %767 = vperm.xlu0 %766, %v734
    %v768 = vpop.permute.xlu0 %767
    %v771 = vsel %vm222, %v720, 0
    %v774 = vsel %vm222, %v721, 0
    %v777 = vsel %vm222, %v722, 0
    %v780 = vsel %vm222, %v723, 0
    %v783 = vsel %vm222, %v724, 0
    %v786 = vsel %vm222, %v725, 0
    %v789 = vsel %vm222, %v726, 0
    %v792 = vsel %vm244, %v718, 0
    %794 = vmatprep.subr.mxu0 0.0
    %795 = vmatpush1.msra.mxu0 %v712
    %796 = vmatprep.subr.mxu0 0.0
    %797 = vmatpush1.msra.mxu0 %v713
    %798 = vmatprep.subr.mxu0 0.0
    %799 = vmatpush1.msra.mxu0 %v714
    %800 = vmatprep.subr.mxu0 0.0
    %801 = vmatpush1.msra.mxu0 %v715
    %802 = vmatprep.subr.mxu0 0.0
    %803 = vmatpush1.msra.mxu0 %v716
    %804 = vmatprep.subr.mxu0 0.0
    %805 = vmatpush1.msra.mxu0 %v717
    %806 = vmatprep.subr.mxu0 0.0
    %807 = vmatpush1.msra.mxu0 %v792
    %808 = vmatprep.subr.mxu0 0.0
    %809 = vmatpush1.msra.mxu0 0.0
    %810 = vmatprep.subr.mxu0 0.0
    %811 = vmatpush1.msra.mxu0 0.0
    %812 = vmatprep.subr.mxu0 0.0
    %813 = vmatpush1.msra.mxu0 0.0
    %814 = vmatprep.subr.mxu0 0.0
    %815 = vmatpush1.msra.mxu0 0.0
    %816 = vmatprep.subr.mxu0 0.0
    %817 = vmatpush1.msra.mxu0 0.0
    %818 = vmatprep.subr.mxu0 0.0
    %819 = vmatpush1.msra.mxu0 0.0
    %820 = vmatprep.subr.mxu0 0.0
    %821 = vmatpush1.msra.mxu0 0.0
    %822 = vmatprep.subr.mxu0 0.0
    %823 = vmatpush1.msra.mxu0 0.0
    %824 = vmatprep.subr.mxu0 0.0
    %825 = vmatpush1.msra.mxu0 0.0
    %826 = vmatprep.subr.mxu0 0.0
    %827 = vmatpush1.msra.mxu0 0.0
    %828 = vmatprep.subr.mxu0 0.0
    %829 = vmatpush1.msra.mxu0 0.0
    %830 = vmatprep.subr.mxu0 0.0
    %831 = vmatpush1.msra.mxu0 0.0
    %832 = vmatprep.subr.mxu0 0.0
    %833 = vmatpush1.msra.mxu0 0.0
    %834 = vmatprep.subr.mxu0 0.0
    %835 = vmatpush1.msra.mxu0 0.0
    %836 = vmatprep.subr.mxu0 0.0
    %837 = vmatpush1.msra.mxu0 0.0
    %838 = vmatprep.subr.mxu0 0.0
    %839 = vmatpush1.msra.mxu0 0.0
    %840 = vmatprep.subr.mxu0 0.0
    %841 = vmatpush1.msra.mxu0 0.0
    %842 = vmatprep.subr.mxu0 0.0
    %843 = vmatpush1.msra.mxu0 0.0
    %844 = vmatprep.subr.mxu0 0.0
    %845 = vmatpush1.msra.mxu0 0.0
    %846 = vmatprep.subr.mxu0 0.0
    %847 = vmatpush1.msra.mxu0 0.0
    %848 = vmatprep.subr.mxu0 0.0
    %849 = vmatpush1.msra.mxu0 0.0
    %850 = vmatprep.subr.mxu0 0.0
    %851 = vmatpush1.msra.mxu0 0.0
    %852 = vmatprep.subr.mxu0 0.0
    %853 = vmatpush1.msra.mxu0 0.0
    %854 = vmatprep.subr.mxu0 0.0
    %855 = vmatpush1.msra.mxu0 0.0
    %856 = vmatprep.subr.mxu0 0.0
    %857 = vmatpush1.msra.mxu0 0.0
    %858 = vmatprep.mubr.f32.mxu0 0.0
    %859 = vmatmul.mubr.f32.gmra.mrb[0].mxu0 %v771
    %v860 = vpop.f32.mrb[0].mxu0
    %v861 = vadd.f32 %v738, %v860
    %v862 = vpop.f32.mrb[0].mxu0
    %863 = vmatprep.mubr.f32.mxu0 0.0
    %864 = vmatmul.mubr.f32.gmra.mrb[0].mxu0 %v774
    %v865 = vpop.f32.mrb[0].mxu0
    %v866 = vadd.f32 %v743, %v865
    %v867 = vpop.f32.mrb[0].mxu0
    %868 = vmatprep.mubr.f32.mxu0 0.0
    %869 = vmatmul.mubr.f32.gmra.mrb[0].mxu0 %v777
    %v870 = vpop.f32.mrb[0].mxu0
    %v871 = vadd.f32 %v748, %v870
    %v872 = vpop.f32.mrb[0].mxu0
    %873 = vmatprep.mubr.f32.mxu0 0.0
    %874 = vmatmul.mubr.f32.gmra.mrb[0].mxu0 %v780
    %v875 = vpop.f32.mrb[0].mxu0
    %v876 = vadd.f32 %v753, %v875
    %v877 = vpop.f32.mrb[0].mxu0
    %878 = vmatprep.mubr.f32.mxu0 0.0
    %879 = vmatmul.mubr.f32.gmra.mrb[0].mxu0 %v783
    %v880 = vpop.f32.mrb[0].mxu0
    %v881 = vadd.f32 %v758, %v880
    %v882 = vpop.f32.mrb[0].mxu0
    %883 = vmatprep.mubr.f32.mxu0 0.0
    %884 = vmatmul.mubr.f32.gmra.mrb[0].mxu0 %v786
    %v885 = vpop.f32.mrb[0].mxu0
    %v886 = vadd.f32 %v763, %v885
    %v887 = vpop.f32.mrb[0].mxu0
    %888 = vmatprep.mubr.f32.mxu0 0.0
    %889 = vmatmul.mubr.f32.gmra.mrb[0].mxu0 %v789
    %v890 = vpop.f32.mrb[0].mxu0
    %v891 = vadd.f32 %v768, %v890
    %v892 = vpop.f32.mrb[0].mxu0
    %893 = vdwg.mxu0
    %v894 = vmax.f32 %v861, 0.0
    %v895 = vmax.f32 %v866, 0.0
    %v896 = vmax.f32 %v871, 0.0
    %v897 = vmax.f32 %v876, 0.0
    %v898 = vmax.f32 %v881, 0.0
    %v899 = vmax.f32 %v886, 0.0
    %v900 = vmax.f32 %v891, 0.0
    %s901 = scalar_lea.vmem %s1, 280
    %v902 = vld [vmem:[%s901] sm:$0xff]
    %v903 = vld [vmem:[%s901 + $0x8] sm:$0xff]
    %v904 = vld [vmem:[%s901 + $0x10] sm:$0xff]
    %v905 = vld [vmem:[%s901 + $0x18] sm:$0xff]
    %v906 = vld [vmem:[%s901 + $0x20] sm:$0xff]
    %v907 = vld [vmem:[%s901 + $0x28] sm:$0xff]
    %v908 = vld [vmem:[%s901 + $0x30] sm:$0x3]
    %s909 = scalar_lea.vmem %s2, 280
    %v910 = vld [vmem:[%s909] sm:$0x1]
    %912 = vset.pattern.permute.xlu0 0
    %913 = vperm.xlu0 %912, %v902
    %v914 = vpop.permute.xlu0 %913
    %917 = vset.pattern.permute.xlu0 0
    %918 = vperm.xlu0 %917, %v903
    %v919 = vpop.permute.xlu0 %918
    %922 = vset.pattern.permute.xlu0 0
    %923 = vperm.xlu0 %922, %v904
    %v924 = vpop.permute.xlu0 %923
    %927 = vset.pattern.permute.xlu0 0
    %928 = vperm.xlu0 %927, %v905
    %v929 = vpop.permute.xlu0 %928
    %932 = vset.pattern.permute.xlu0 0
    %933 = vperm.xlu0 %932, %v906
    %v934 = vpop.permute.xlu0 %933
    %937 = vset.pattern.permute.xlu0 0
    %938 = vperm.xlu0 %937, %v907
    %v939 = vpop.permute.xlu0 %938
    %942 = vset.pattern.permute.xlu0 0
    %943 = vperm.xlu0 %942, %v908
    %v944 = vpop.permute.xlu0 %943
    %v946 = vmul.f32 %v914, %v894
    %v947 = vmul.f32 %v919, %v895
    %v948 = vmul.f32 %v924, %v896
    %v949 = vmul.f32 %v929, %v897
    %v950 = vmul.f32 %v934, %v898
    %v951 = vmul.f32 %v939, %v899
    %v952 = vmul.f32 %v944, %v900
    %v953 = vadd.f32 %v946, %v947
    %v954 = vadd.f32 %v953, %v948
    %v955 = vadd.f32 %v954, %v949
    %v956 = vadd.f32 %v955, %v950
    %v957 = vadd.f32 %v956, %v951
    %v958 = vsel %vm244, %v952, 0.0
    %v959 = vadd.f32 %v957, %v958
    %v960 = vrot.slane %v959, 4
    %v961 = vadd.f32 %v959, %v960
    %v962 = vrot.slane %v961, 2
    %v963 = vadd.f32 %v961, %v962
    %v964 = vrot.slane %v963, 1
    %v965 = vadd.f32 %v963, %v964
    %967 = vset.pattern.permute.xlu0 0
    %968 = vperm.xlu0 %967, %v910
    %v969 = vpop.permute.xlu0 %968
    %v971 = vadd.f32 %v965, %v969
    %972 = vst [vmem:[#allocation2] sm:$0x1] %v971
    // Predicated region
    $region14: #{tpu_custom_call.1} parent=1 // pred_check
      _
    $region15: #{tpu_custom_call.1} parent=1 // pred_check_branch
      %974 = sbr.rel (0) target = $region17
    $region16: #{tpu_custom_call.1} parent=1 // pred_region
      %s976 = ssub.s32 16, 16
      %977 = vsyncadd [#allocation3], %s976
      %s979 = sshll.u32 [#allocation2], 4
      %s980 = int_to_ptr.vmem [resolvable:$true] %s979
      %982 = dma.vmem_to_hbm [thread:$0]  %s980, 16, %s3, [#allocation3]
    $region17: #{tpu_custom_call.1} parent=1 // pred_fallthru
      _
    // Predicated region
    $region18: #{tpu_custom_call.1} parent=1 // pred_check
      _
    $region19: #{tpu_custom_call.1} parent=1 // pred_check_branch
      %984 = sbr.rel (0) target = $region21
    $region20: #{tpu_custom_call.1} parent=1 // pred_region
      %985 = dma.done [#allocation3], 16
    $region21: #{tpu_custom_call.1} parent=1 // pred_fallthru
      _
    %986 = vsyncpa [#allocation3], 1

</llo_original>
